<compile_context>
chip_gen: v7x
topology: tpu7x:2x2x1
jax: 0.10.0
libtpu: 0.0.40
codegen_flags: <defaults>
</compile_context>

<pallas_src>
import functools

import numpy as np
import jax
import jax.numpy as jnp
from jax.experimental import pallas as pl
from jax.experimental.pallas import tpu as pltpu

WIN_LEN = 400
WIN_INC = 100                  # hop_length
FFT_LEN = 512
N_FREQ = FFT_LEN // 2 + 1      # 257 (onesided)
LANE = 128


def _istft_kernel(x_ref, basis_ref, envinv_ref, out_ref, *, bblk, T, hop_pad, n_folds):
    """x_ref: (bblk*T, K); basis_ref: (K, n_folds*hop_pad);
    envinv_ref: (1, n_rows, hop_pad); out_ref: (bblk, n_rows, hop_pad)."""
    # Single fused inverse-rFFT matmul on the MXU (window/scale folded into basis).
    frames = jnp.dot(x_ref[...], basis_ref[...],
                     preferred_element_type=jnp.float32)       # (bblk*T, n_folds*hop_pad)
    frames = frames.reshape(bblk, T, n_folds * hop_pad)

    # Fold overlap-add as a value accumulation: n_folds lane-aligned slabs,
    # each shifted by j sublane rows (concat with zeros), summed once.
    acc = None
    for j in range(n_folds):
        slab = frames[:, :, j * hop_pad:(j + 1) * hop_pad]     # (bblk, T, hop_pad)
        parts = []
        if j > 0:
            parts.append(jnp.zeros((bblk, j, hop_pad), jnp.float32))
        parts.append(slab)
        if n_folds - 1 - j > 0:
            parts.append(jnp.zeros((bblk, n_folds - 1 - j, hop_pad), jnp.float32))
        shifted = jnp.concatenate(parts, axis=1) if len(parts) > 1 else slab
        acc = shifted if acc is None else acc + shifted        # (bblk, n_rows, hop_pad)

    # Envelope division folded in; single full (lane-dense, unmasked) store.
    out_ref[...] = acc * envinv_ref[...]


def _pick_bblk(B, T, target_m=2048):
    """Largest divisor of B with bblk*T <= target_m, preferring 8-aligned matmul
    rows and >=4 (else >=2) grid steps so both TensorCores stay pipelined."""
    divs = [d for d in range(1, B + 1) if B % d == 0 and d * T <= target_m]
    if not divs:
        return 1
    aligned = [d for d in divs if (d * T) % 8 == 0 or d == B]
    pool = aligned if aligned else divs
    for min_steps in (4, 2, 1):
        cand = [d for d in pool if B // d >= min_steps]
        if cand:
            return max(cand)
    return max(pool)


def istft_pallas(x):
    """x: complex64 (B, n_fft//2+1, n_frames) -> float32 (B, hop*(n_frames-1))."""
    B, F, T = x.shape
    assert F == N_FREQ
    n_fft, hop, win_len = FFT_LEN, WIN_INC, WIN_LEN
    half = n_fft // 2
    n_folds = -(-n_fft // hop)                 # 6
    hop_pad = -(-hop // LANE) * LANE           # 128: lane-dense fold slabs
    n_rows = T + n_folds - 1                   # fold rows per batch element
    out_len = hop * (T - 1)
    K = 2 * half                               # 512 = Re(k=0..256) ++ Im(k=1..255)

    # --- deterministic "parameters" (plain numpy) -----------------------------
    # torch default window = ones(win_len), centered (zero-padded) to n_fft.
    pad_l = (n_fft - win_len) // 2
    w = np.zeros((n_fft,), np.float64)
    w[pad_l:pad_l + win_len] = 1.0

    # Inverse-rFFT basis with one-sided symmetry weights, 1/n_fft and the window
    # folded in.  Imag rows for DC / Nyquist are structurally zero (irfft drops
    # the imaginary part of those bins), so they are omitted -> K = 512 exactly.
    k = np.arange(N_FREQ, dtype=np.float64)[:, None]
    n = np.arange(n_fft, dtype=np.float64)[None, :]
    ang = 2.0 * np.pi * k * n / n_fft
    c = np.where((k == 0) | (k == half), 1.0, 2.0)
    cos_rows = w[None, :] * c * np.cos(ang) / n_fft                   # (257, 512)
    sin_rows = -w[None, :] * 2.0 * np.sin(ang[1:half, :]) / n_fft     # (255, 512)
    basis_time = np.concatenate([cos_rows, sin_rows], axis=0)         # (512, 512)

    # Scatter the 512 frame samples into 6 lane-dense 128-wide slabs (zero pad).
    basis = np.zeros((K, n_folds * hop_pad), np.float32)
    frame_full = np.zeros((K, n_folds * hop), np.float64)
    frame_full[:, :n_fft] = basis_time
    for j in range(n_folds):
        basis[:, j * hop_pad:j * hop_pad + hop] = frame_full[:, j * hop:(j + 1) * hop]

    # Window envelope (sum of squared windows) reciprocal, fold layout, lane-padded.
    env = np.zeros((n_rows * hop,), np.float64)
    for t in range(T):
        env[t * hop:t * hop + n_fft] += w * w
    # torch.istft errors if the envelope underflows inside the kept region; for
    # these fixed params it never does -- assert the assumption instead of faking it.
    assert np.all(env[half:half + out_len] > 1e-11)
    env_inv = np.where(env > 1e-11, 1.0 / np.maximum(env, 1e-11), 0.0)
    env_inv_fold = np.zeros((1, n_rows, hop_pad), np.float32)
    env_inv_fold[0, :, :hop] = env_inv.reshape(n_rows, hop)

    # --- kernel input: (B*T, 512) = [Re(k=0..256) | Im(k=1..255)] --------------
    xt = jnp.transpose(x, (0, 2, 1))                                  # (B, T, F) complex
    x_re = jnp.real(xt).astype(jnp.float32)
    x_im = jnp.imag(xt).astype(jnp.float32)
    x_ri = jnp.concatenate([x_re, x_im[:, :, 1:half]], axis=-1)       # (B, T, 512)
    x_ri = x_ri.reshape(B * T, K)                                     # free (contiguous)

    bblk = _pick_bblk(B, T)
    grid = (B // bblk,)

    kernel = functools.partial(_istft_kernel, bblk=bblk, T=T,
                               hop_pad=hop_pad, n_folds=n_folds)

    out = pl.pallas_call(
        kernel,
        out_shape=jax.ShapeDtypeStruct((B, n_rows, hop_pad), jnp.float32),
        grid_spec=pltpu.PrefetchScalarGridSpec(
            num_scalar_prefetch=0,
            grid=grid,
            in_specs=[
                pl.BlockSpec((bblk * T, K), lambda b: (b, 0)),            # [Re|Im] rows
                pl.BlockSpec((K, n_folds * hop_pad), lambda b: (0, 0)),   # basis (resident)
                pl.BlockSpec((1, n_rows, hop_pad), lambda b: (0, 0, 0)),  # 1/envelope
            ],
            out_specs=pl.BlockSpec((bblk, n_rows, hop_pad), lambda b: (b, 0, 0)),
        ),
        compiler_params=pltpu.CompilerParams(
            dimension_semantics=("parallel",),
            vmem_limit_bytes=48 * 1024 * 1024,
        ),
    )(x_ri, jnp.asarray(basis), jnp.asarray(env_inv_fold))

    # Trim pad lanes, un-fold, center-trim (n_fft//2 each side) in the wrapper.
    y = out[:, :, :hop].reshape(B, n_rows * hop)
    return y[:, half:half + out_len]


def istft_ref(x, n_fft=FFT_LEN, hop=WIN_INC, win_len=WIN_LEN):
    """Pure-JAX reference replicating torch.istft default semantics."""
    B, F, T = x.shape
    pad_l = (n_fft - win_len) // 2
    w = jnp.zeros((n_fft,), jnp.float32).at[pad_l:pad_l + win_len].set(1.0)
    frames = jnp.fft.irfft(x, n=n_fft, axis=1)            # (B, n_fft, T)
    frames = frames * w[None, :, None]
    full_len = n_fft + hop * (T - 1)
    y = jnp.zeros((B, full_len), jnp.float32)
    env = jnp.zeros((full_len,), jnp.float32)
    for t in range(T):
        y = y.at[:, t * hop:t * hop + n_fft].add(frames[:, :, t])
        env = env.at[t * hop:t * hop + n_fft].add(w * w)
    out_len = hop * (T - 1)
    y = y[:, n_fft // 2:n_fft // 2 + out_len]
    env = env[n_fft // 2:n_fft // 2 + out_len]
    return y / env[None, :]


if __name__ == "__main__":
    key = jax.random.PRNGKey(0)
    kr, ki = jax.random.split(key)
    B, T = 2, 8                                   # small test: 2 x 257 x 8 spectrogram
    x = (jax.random.normal(kr, (B, N_FREQ, T), jnp.float32)
         + 1j * jax.random.normal(ki, (B, N_FREQ, T), jnp.float32)).astype(jnp.complex64)

    y = jax.block_until_ready(istft_pallas(x))
    y_ref = istft_ref(x)

    assert y.shape == (B, WIN_INC * (T - 1)), y.shape
    np.testing.assert_allclose(np.asarray(y), np.asarray(y_ref), rtol=2e-3, atol=2e-3)
    print("KERNEL_OK")
</pallas_src>

<mosaic_0001>
module attributes {stable_mosaic.version = 11 : i64} {
  func.func @_istft_kernel(%arg0: i32, %arg1: memref<8x512xf32, #tpu.memory_space<vmem>>, %arg2: memref<512x768xf32, #tpu.memory_space<vmem>>, %arg3: memref<1x13x128xf32, #tpu.memory_space<vmem>>, %arg4: memref<1x13x128xf32, #tpu.memory_space<vmem>>) attributes {dimension_semantics = [#tpu.dimension_semantics<parallel>], iteration_bounds = array<i64: 2>, scalar_prefetch = 0 : i64, scratch_operands = 0 : i64, tpu.core_type = #tpu.core_type<tc>, window_params = [{transform_indices = @transform_0, window_bounds = array<i64: 8, 512>}, {pipeline_mode = #tpu.pipeline_mode<synchronous>, transform_indices = @transform_1, window_bounds = array<i64: 512, 768>}, {pipeline_mode = #tpu.pipeline_mode<synchronous>, transform_indices = @transform_2, window_bounds = array<i64: 1, 13, 128>}, {transform_indices = @transform_3, window_bounds = array<i64: 1, 13, 128>}]} {
    %c0 = arith.constant 0 : index
    %c0_0 = arith.constant 0 : index
    %0 = vector.load %arg1[%c0, %c0_0] : memref<8x512xf32, #tpu.memory_space<vmem>>, vector<8x512xf32>
    %c0_1 = arith.constant 0 : index
    %c0_2 = arith.constant 0 : index
    %1 = vector.load %arg2[%c0_1, %c0_2] : memref<512x768xf32, #tpu.memory_space<vmem>>, vector<512x768xf32>
    %cst = arith.constant dense<0.000000e+00> : vector<8x768xf32>
    %2 = tpu.matmul %0, %1, %cst {dimension_numbers = #tpu.dot_dimension_numbers<[1], [0], [0], [1], [0, 0, 1, 1], [], []>} : vector<8x512xf32>, vector<512x768xf32>, vector<8x768xf32> -> vector<8x768xf32>
    %3 = vector.shape_cast %2 : vector<8x768xf32> to vector<1x8x768xf32>
    %4 = vector.extract_strided_slice %3 {offsets = [0, 0, 0], sizes = [1, 8, 128], strides = [1, 1, 1]} : vector<1x8x768xf32> to vector<1x8x128xf32>
    %cst_3 = arith.constant 0.000000e+00 : f32
    %5 = vector.broadcast %cst_3 : f32 to vector<1x5x128xf32>
    %6 = tpu.concatenate %4, %5 in 1 : vector<1x8x128xf32>, vector<1x5x128xf32> -> vector<1x13x128xf32>
    %7 = vector.extract_strided_slice %3 {offsets = [0, 0, 128], sizes = [1, 8, 128], strides = [1, 1, 1]} : vector<1x8x768xf32> to vector<1x8x128xf32>
    %cst_4 = arith.constant 0.000000e+00 : f32
    %8 = vector.broadcast %cst_4 : f32 to vector<1x1x128xf32>
    %cst_5 = arith.constant 0.000000e+00 : f32
    %9 = vector.broadcast %cst_5 : f32 to vector<1x4x128xf32>
    %10 = tpu.concatenate %8, %7, %9 in 1 : vector<1x1x128xf32>, vector<1x8x128xf32>, vector<1x4x128xf32> -> vector<1x13x128xf32>
    %11 = arith.addf %6, %10 : vector<1x13x128xf32>
    %12 = vector.extract_strided_slice %3 {offsets = [0, 0, 256], sizes = [1, 8, 128], strides = [1, 1, 1]} : vector<1x8x768xf32> to vector<1x8x128xf32>
    %cst_6 = arith.constant 0.000000e+00 : f32
    %13 = vector.broadcast %cst_6 : f32 to vector<1x2x128xf32>
    %cst_7 = arith.constant 0.000000e+00 : f32
    %14 = vector.broadcast %cst_7 : f32 to vector<1x3x128xf32>
    %15 = tpu.concatenate %13, %12, %14 in 1 : vector<1x2x128xf32>, vector<1x8x128xf32>, vector<1x3x128xf32> -> vector<1x13x128xf32>
    %16 = arith.addf %11, %15 : vector<1x13x128xf32>
    %17 = vector.extract_strided_slice %3 {offsets = [0, 0, 384], sizes = [1, 8, 128], strides = [1, 1, 1]} : vector<1x8x768xf32> to vector<1x8x128xf32>
    %cst_8 = arith.constant 0.000000e+00 : f32
    %18 = vector.broadcast %cst_8 : f32 to vector<1x3x128xf32>
    %cst_9 = arith.constant 0.000000e+00 : f32
    %19 = vector.broadcast %cst_9 : f32 to vector<1x2x128xf32>
    %20 = tpu.concatenate %18, %17, %19 in 1 : vector<1x3x128xf32>, vector<1x8x128xf32>, vector<1x2x128xf32> -> vector<1x13x128xf32>
    %21 = arith.addf %16, %20 : vector<1x13x128xf32>
    %22 = vector.extract_strided_slice %3 {offsets = [0, 0, 512], sizes = [1, 8, 128], strides = [1, 1, 1]} : vector<1x8x768xf32> to vector<1x8x128xf32>
    %cst_10 = arith.constant 0.000000e+00 : f32
    %23 = vector.broadcast %cst_10 : f32 to vector<1x4x128xf32>
    %cst_11 = arith.constant 0.000000e+00 : f32
    %24 = vector.broadcast %cst_11 : f32 to vector<1x1x128xf32>
    %25 = tpu.concatenate %23, %22, %24 in 1 : vector<1x4x128xf32>, vector<1x8x128xf32>, vector<1x1x128xf32> -> vector<1x13x128xf32>
    %26 = arith.addf %21, %25 : vector<1x13x128xf32>
    %27 = vector.extract_strided_slice %3 {offsets = [0, 0, 640], sizes = [1, 8, 128], strides = [1, 1, 1]} : vector<1x8x768xf32> to vector<1x8x128xf32>
    %cst_12 = arith.constant 0.000000e+00 : f32
    %28 = vector.broadcast %cst_12 : f32 to vector<1x5x128xf32>
    %29 = tpu.concatenate %28, %27 in 1 : vector<1x5x128xf32>, vector<1x8x128xf32> -> vector<1x13x128xf32>
    %30 = arith.addf %26, %29 : vector<1x13x128xf32>
    %c0_13 = arith.constant 0 : index
    %c0_14 = arith.constant 0 : index
    %c0_15 = arith.constant 0 : index
    %31 = vector.load %arg3[%c0_13, %c0_14, %c0_15] : memref<1x13x128xf32, #tpu.memory_space<vmem>>, vector<1x13x128xf32>
    %32 = arith.mulf %30, %31 : vector<1x13x128xf32>
    %c0_16 = arith.constant 0 : index
    %c0_17 = arith.constant 0 : index
    %c0_18 = arith.constant 0 : index
    %33 = vector.load %arg4[%c0_16, %c0_17, %c0_18] : memref<1x13x128xf32, #tpu.memory_space<vmem>>, vector<1x13x128xf32>
    tpu.vector_store %arg4[%c0_16, %c0_17, %c0_18], %32 {strides = array<i32>} : memref<1x13x128xf32, #tpu.memory_space<vmem>>, vector<1x13x128xf32>,
    return
  }
  func.func @transform_0(%arg0: i32) -> (i32, i32) {
    %c0_i32 = arith.constant 0 : i32
    %c0_i32_0 = arith.constant 0 : i32
    return %arg0, %c0_i32 : i32, i32
  }
  func.func @transform_1(%arg0: i32) -> (i32, i32) {
    %c0_i32 = arith.constant 0 : i32
    %c0_i32_0 = arith.constant 0 : i32
    %c0_i32_1 = arith.constant 0 : i32
    return %c0_i32, %c0_i32_0 : i32, i32
  }
  func.func @transform_2(%arg0: i32) -> (i32, i32, i32) {
    %c0_i32 = arith.constant 0 : i32
    %c0_i32_0 = arith.constant 0 : i32
    %c0_i32_1 = arith.constant 0 : i32
    %c0_i32_2 = arith.constant 0 : i32
    return %c0_i32, %c0_i32_0, %c0_i32_1 : i32, i32, i32
  }
  func.func @transform_3(%arg0: i32) -> (i32, i32, i32) {
    %c0_i32 = arith.constant 0 : i32
    %c0_i32_0 = arith.constant 0 : i32
    %c0_i32_1 = arith.constant 0 : i32
    return %arg0, %c0_i32, %c0_i32_0 : i32, i32, i32
  }
}

</mosaic_0001>

<llo_original>
// kernel: tpu_custom_call.1
$region0: #{tpu_custom_call.1}
  #allocation0 [shape = 'u32[]', space=smem, size = 0x4, offset = 0x4, fixed_abs, tag = 'smem constant byte address 0x4 - core index']
  #allocation1 [shape = 'u32[144,128]{1,0:T(1,128)}', space=vmem, size = 0x12000, scoped, tag = 'internal scratch']
  %s0 = inlined_call_operand.hbm [shape: f32[16,512], index: 0, kind: input, shape index: {}]
  %s1 = inlined_call_operand.hbm [shape: f32[512,768], index: 1, kind: input, shape index: {}]
  %s2 = inlined_call_operand.vmem [shape: f32[1,13,128], index: 2, kind: input, shape index: {}]
  %s3 = inlined_call_operand.vmem [shape: f32[2,13,128], index: 3, kind: output, shape index: {}]
  %s4 = sld [smem:[#allocation0]]
  $region53: #{tpu_custom_call.1} parent=0
    _
  %s6 = ssub.s32 1, %s4
  %s7 = scalar_select 0, %s6, %s4
  $region1: #{tpu_custom_call.1} parent=0
    #allocation2 [shape = 'u8[32768]{0}', space=vmem, size = 0x8000, scoped, tag = 'input window, operand 0']
    #allocation3 [shape = 's32[2]{0}', space=sflag, size = 0x8, scoped, tag = 'scoped memory for tpu_custom_call.1']
    #allocation4 [shape = 'u8[1572864]{0}', space=vmem, size = 0x180000, scoped, tag = 'input window, operand 1, single buffered']
    #allocation5 [shape = 's32[1]{0}', space=sflag, size = 0x4, scoped, tag = 'scoped memory for tpu_custom_call.1']
    %8 = vsyncpa [#allocation3], 0
    %s9 = scalar_lea.sflag [#allocation3], 1
    %10 = vsyncpa %s9, 0
    %11 = vsyncpa [#allocation5], 0
    loop: start=0, step=1, limit=4
    $region2: #{tpu_custom_call.1} parent=1 // loop_pre_header
      _
    $region3: #{tpu_custom_call.1} parent=1 // loop_header
      %s13 = sphi 0, %s17
      %p14 = scmp.ge.s32.totalorder %s13, 4
      %s23 = sphi 0, %s25
      %s26 = sphi 0, %s23
      %s27 = sphi 0, %s26
      %s43 = sphi 0, %s27
      %s47 = sphi 0, %s47
      %s49 = sphi 0, %s47
      %s50 = sphi 0, %s49
      %s64 = sphi 0, %s50
      %s68 = sphi 0, %s68
      %s70 = sphi 0, %s68
      %s71 = sphi 0, %s70
      %s85 = sphi 0, %s71
      %s91 = sphi 0, %s93
      %s94 = sphi 0, %s91
      %s95 = sphi 0, %s94
      %s111 = sphi 0, %s95
    $region4: #{tpu_custom_call.1} parent=1 // loop_header_branch
      %16 = sbr.rel (%p14) target = $region8
    $region5: #{tpu_custom_call.1} parent=1 // loop_body
      %s18 = ssub.s32 %s13, 1
      %s19 = ssub.s32 %s13, 2
      %s20 = sadd.s32 %s13, 1
      %s21 = ssub.s32 %s13, %s20
      %p22 = scmp.eq.s32.totalorder %s21, 0
      %s24 = sadd.s32 %s23, 1
      %s25 = scalar_select %p22, %s23, %s24
      %p28 = pneg %p22
      %p29 = scmp.eq.s32.totalorder %s13, 1
      %p30 = por %p28, %p29
      %p31 = scmp.ne.s32.totalorder %s23, %s26
      %p32 = scmp.eq.s32.totalorder %s13, 0
      %p33 = por %p31, %p32
      %p34 = scmp.ne.s32.totalorder %s23, %s26
      %p35 = scmp.eq.s32.totalorder %s18, 1
      %p36 = por %p34, %p35
      %p37 = scmp.ne.s32.totalorder %s26, %s27
      %p38 = scmp.eq.s32.totalorder %s18, 0
      %p39 = por %p37, %p38
      %p40 = scmp.ne.s32.totalorder %s26, %s27
      %p41 = scmp.eq.s32.totalorder %s19, 1
      %p42 = por %p40, %p41
      %p44 = scmp.ne.s32.totalorder %s27, %s43
      %p45 = scmp.eq.s32.totalorder %s19, 0
      %p46 = por %p44, %p45
      %s48 = sadd.s32 %s47, 1
      %p51 = scmp.eq.s32.totalorder %s13, 1
      %p52 = scmp.ne.s32.totalorder %s47, %s49
      %p53 = scmp.eq.s32.totalorder %s13, 0
      %p54 = por %p52, %p53
      %p55 = scmp.ne.s32.totalorder %s47, %s49
      %p56 = scmp.eq.s32.totalorder %s18, 1
      %p57 = por %p55, %p56
      %p58 = scmp.ne.s32.totalorder %s49, %s50
      %p59 = scmp.eq.s32.totalorder %s18, 0
      %p60 = por %p58, %p59
      %p61 = scmp.ne.s32.totalorder %s49, %s50
      %p62 = scmp.eq.s32.totalorder %s19, 1
      %p63 = por %p61, %p62
      %p65 = scmp.ne.s32.totalorder %s50, %s64
      %p66 = scmp.eq.s32.totalorder %s19, 0
      %p67 = por %p65, %p66
      %s69 = sadd.s32 %s68, 1
      %p72 = scmp.eq.s32.totalorder %s13, 1
      %p73 = scmp.ne.s32.totalorder %s68, %s70
      %p74 = scmp.eq.s32.totalorder %s13, 0
      %p75 = por %p73, %p74
      %p76 = scmp.ne.s32.totalorder %s68, %s70
      %p77 = scmp.eq.s32.totalorder %s18, 1
      %p78 = por %p76, %p77
      %p79 = scmp.ne.s32.totalorder %s70, %s71
      %p80 = scmp.eq.s32.totalorder %s18, 0
      %p81 = por %p79, %p80
      %p82 = scmp.ne.s32.totalorder %s70, %s71
      %p83 = scmp.eq.s32.totalorder %s19, 1
      %p84 = por %p82, %p83
      %p86 = scmp.ne.s32.totalorder %s71, %s85
      %p87 = scmp.eq.s32.totalorder %s19, 0
      %p88 = por %p86, %p87
      %s89 = ssub.s32 %s13, %s20
      %p90 = scmp.eq.s32.totalorder %s89, 0
      %s92 = sadd.s32 %s91, 1
      %s93 = scalar_select %p90, %s91, %s92
      %p96 = pneg %p90
      %p97 = scmp.eq.s32.totalorder %s13, 1
      %p98 = por %p96, %p97
      %p99 = scmp.ne.s32.totalorder %s91, %s94
      %p100 = scmp.eq.s32.totalorder %s13, 0
      %p101 = por %p99, %p100
      %p102 = scmp.ne.s32.totalorder %s91, %s94
      %p103 = scmp.eq.s32.totalorder %s18, 1
      %p104 = por %p102, %p103
      %p105 = scmp.ne.s32.totalorder %s94, %s95
      %p106 = scmp.eq.s32.totalorder %s18, 0
      %p107 = por %p105, %p106
      %p108 = scmp.ne.s32.totalorder %s94, %s95
      %p109 = scmp.eq.s32.totalorder %s19, 1
      %p110 = por %p108, %p109
      %p112 = scmp.ne.s32.totalorder %s95, %s111
      %p113 = scmp.eq.s32.totalorder %s19, 0
      %p114 = por %p112, %p113
      %p115 = scmp.le.s32.totalorder 1, %s13
      %p116 = scmp.lt.s32.totalorder %s13, 3
      %p117 = pnand %p115, %p116
      %p118 = pneg %p117
      // Predicated region
      $region9: #{tpu_custom_call.1} parent=5 // pred_check
        _
      $region10: #{tpu_custom_call.1} parent=5 // pred_check_branch
        %120 = sbr.rel (%p117) target = $region12
      $region11: #{tpu_custom_call.1} parent=5 // pred_region
        %s121 = ssub.s32 %s13, 1
        // Predicated region
        $region13: #{tpu_custom_call.1} parent=11 // pred_check
          %p122 = pneg %p60
        $region14: #{tpu_custom_call.1} parent=11 // pred_check_branch
          %124 = sbr.rel (%p122) target = $region16
        $region15: #{tpu_custom_call.1} parent=11 // pred_region
          %s126 = ssub.s32 49152, 49152
          %127 = vsyncadd [#allocation5], %s126
          %s128 = sshll.u32 [#allocation4], 4
          %s129 = int_to_ptr.vmem [resolvable:$true] %s128
          %134 = dma.hbm_to_vmem [thread:$0]  %s1, 49152, %s129, [#allocation5], 768, 768, 48
        $region16: #{tpu_custom_call.1} parent=11 // pred_fallthru
          _
        // Predicated region
        $region17: #{tpu_custom_call.1} parent=11 // pred_check
          %p135 = pneg %p81
        $region18: #{tpu_custom_call.1} parent=11 // pred_check_branch
          %137 = sbr.rel (%p135) target = $region20
        $region19: #{tpu_custom_call.1} parent=11 // pred_region
          _
        $region20: #{tpu_custom_call.1} parent=11 // pred_fallthru
          _
      $region12: #{tpu_custom_call.1} parent=5 // pred_fallthru
        _
      %p138 = scmp.lt.s32.totalorder %s13, 2
      // Predicated region
      $region21: #{tpu_custom_call.1} parent=5 // pred_check
        %p139 = pneg %p138
      $region22: #{tpu_custom_call.1} parent=5 // pred_check_branch
        %141 = sbr.rel (%p139) target = $region24
      $region23: #{tpu_custom_call.1} parent=5 // pred_region
        // Predicated region
        $region25: #{tpu_custom_call.1} parent=23 // pred_check
          %p142 = pneg %p33
        $region26: #{tpu_custom_call.1} parent=23 // pred_check_branch
          %144 = sbr.rel (%p142) target = $region28
        $region27: #{tpu_custom_call.1} parent=23 // pred_region
          %s145 = sand.u32 %s23, 1
          %s146 = scalar_lea.sflag [#allocation3], %s145
          %s147 = sand.u32 %s23, 1
          %s148 = smul.addr %s147, 32
          %s149 = scalar_lea.vmem [#allocation2], %s148
          %s151 = ssub.s32 512, 512
          %152 = vsyncadd %s146, %s151
          %s153 = smul.addr %s13, 4
          %s154 = smul.addr %s153, 128
          %s155 = scalar_lea.hbm %s0, %s154
          %s157 = sshll.u32 %s149, 4
          %s158 = int_to_ptr.vmem [resolvable:$true] %s157
          %160 = dma.hbm_to_vmem [thread:$0]  %s155, 512, %s158, %s146
        $region28: #{tpu_custom_call.1} parent=23 // pred_fallthru
          _
      $region24: #{tpu_custom_call.1} parent=5 // pred_fallthru
        _
      %p161 = scmp.le.s32.totalorder 1, %s13
      %p162 = scmp.lt.s32.totalorder %s13, 3
      %p163 = pnand %p161, %p162
      %p164 = pneg %p163
      // Predicated region
      $region29: #{tpu_custom_call.1} parent=5 // pred_check
        _
      $region30: #{tpu_custom_call.1} parent=5 // pred_check_branch
        %166 = sbr.rel (%p163) target = $region32
      $region31: #{tpu_custom_call.1} parent=5 // pred_region
        %s167 = ssub.s32 %s13, 1
        %s168 = sand.u32 %s26, 1
        %s169 = scalar_lea.sflag [#allocation3], %s168
        %s170 = sand.u32 %s26, 1
        %s171 = smul.addr %s170, 32
        %s172 = scalar_lea.vmem [#allocation2], %s171
        // Predicated region
        $region33: #{tpu_custom_call.1} parent=31 // pred_check
          %p173 = pneg %p39
        $region34: #{tpu_custom_call.1} parent=31 // pred_check_branch
          %175 = sbr.rel (%p173) target = $region36
        $region35: #{tpu_custom_call.1} parent=31 // pred_region
          %176 = dma.done %s169, 512
        $region36: #{tpu_custom_call.1} parent=31 // pred_fallthru
          _
        // Predicated region
        $region37: #{tpu_custom_call.1} parent=31 // pred_check
          %p177 = pneg %p60
        $region38: #{tpu_custom_call.1} parent=31 // pred_check_branch
          %179 = sbr.rel (%p177) target = $region40
        $region39: #{tpu_custom_call.1} parent=31 // pred_region
          %180 = dma.done [#allocation5], 49152
        $region40: #{tpu_custom_call.1} parent=31 // pred_fallthru
          _
        %s181 = sand.u32 %s26, 1
        %s182 = scalar_lea.sflag [#allocation3], %s181
        %s183 = sand.u32 %s26, 1
        %s184 = smul.addr %s183, 32
        %s185 = scalar_lea.vmem [#allocation2], %s184
        %p186 = pneg %p39
        %p187 = pneg %p36
        %p188 = pneg %p60
        %p189 = pneg %p57
        %p190 = pneg %p81
        %p191 = pneg %p78
        %p192 = pneg %p107
        %p193 = pneg %p104
        %p194 = scmp.lt.s32.totalorder %s18, 1
        %s195 = scalar_select %p194, %s18, 1
        %s196 = smul.addr %s195, 2
        %s197 = smul.addr %s196, 8
        %s198 = scalar_lea.vmem %s3, %s197
        %p199 = scmp.lt.s32.totalorder %s18, 1
        %s200 = scalar_select %p199, %s18, 1
        %s201 = smul.addr %s200, 2
        %s202 = smul.addr %s201, 8
        %s203 = scalar_lea.vmem %s3, %s202
        %v204 = vld [vmem:[%s172] sm:$0xff]
        %v205 = vld [vmem:[%s172 + $0x8] sm:$0xff]
        %v206 = vld [vmem:[%s172 + $0x10] sm:$0xff]
        %v207 = vld [vmem:[%s172 + $0x18] sm:$0xff]
        %v208 = vld [vmem:[#allocation4] sm:$0xff]
        %v209 = vld [vmem:[#allocation4 + $0x8] sm:$0xff]
        %v210 = vld [vmem:[#allocation4 + $0x10] sm:$0xff]
        %v211 = vld [vmem:[#allocation4 + $0x18] sm:$0xff]
        %v212 = vld [vmem:[#allocation4 + $0x20] sm:$0xff]
        %v213 = vld [vmem:[#allocation4 + $0x28] sm:$0xff]
        %v214 = vld [vmem:[#allocation4 + $0x30] sm:$0xff]
        %v215 = vld [vmem:[#allocation4 + $0x38] sm:$0xff]
        %v216 = vld [vmem:[#allocation4 + $0x40] sm:$0xff]
        %v217 = vld [vmem:[#allocation4 + $0x48] sm:$0xff]
        %v218 = vld [vmem:[#allocation4 + $0x50] sm:$0xff]
        %v219 = vld [vmem:[#allocation4 + $0x58] sm:$0xff]
        %v220 = vld [vmem:[#allocation4 + $0x60] sm:$0xff]
        %v221 = vld [vmem:[#allocation4 + $0x68] sm:$0xff]
        %v222 = vld [vmem:[#allocation4 + $0x70] sm:$0xff]
        %v223 = vld [vmem:[#allocation4 + $0x78] sm:$0xff]
        %v224 = vld [vmem:[#allocation4 + $0x80] sm:$0xff]
        %v225 = vld [vmem:[#allocation4 + $0x88] sm:$0xff]
        %v226 = vld [vmem:[#allocation4 + $0x90] sm:$0xff]
        %v227 = vld [vmem:[#allocation4 + $0x98] sm:$0xff]
        %v228 = vld [vmem:[#allocation4 + $0xa0] sm:$0xff]
        %v229 = vld [vmem:[#allocation4 + $0xa8] sm:$0xff]
        %v230 = vld [vmem:[#allocation4 + $0xb0] sm:$0xff]
        %v231 = vld [vmem:[#allocation4 + $0xb8] sm:$0xff]
        %v232 = vld [vmem:[#allocation4 + $0xc0] sm:$0xff]
        %v233 = vld [vmem:[#allocation4 + $0xc8] sm:$0xff]
        %v234 = vld [vmem:[#allocation4 + $0xd0] sm:$0xff]
        %v235 = vld [vmem:[#allocation4 + $0xd8] sm:$0xff]
        %v236 = vld [vmem:[#allocation4 + $0xe0] sm:$0xff]
        %v237 = vld [vmem:[#allocation4 + $0xe8] sm:$0xff]
        %v238 = vld [vmem:[#allocation4 + $0xf0] sm:$0xff]
        %v239 = vld [vmem:[#allocation4 + $0xf8] sm:$0xff]
        %v240 = vld [vmem:[#allocation4 + $0x100] sm:$0xff]
        %v241 = vld [vmem:[#allocation4 + $0x108] sm:$0xff]
        %v242 = vld [vmem:[#allocation4 + $0x110] sm:$0xff]
        %v243 = vld [vmem:[#allocation4 + $0x118] sm:$0xff]
        %v244 = vld [vmem:[#allocation4 + $0x120] sm:$0xff]
        %v245 = vld [vmem:[#allocation4 + $0x128] sm:$0xff]
        %v246 = vld [vmem:[#allocation4 + $0x130] sm:$0xff]
        %v247 = vld [vmem:[#allocation4 + $0x138] sm:$0xff]
        %v248 = vld [vmem:[#allocation4 + $0x140] sm:$0xff]
        %v249 = vld [vmem:[#allocation4 + $0x148] sm:$0xff]
        %v250 = vld [vmem:[#allocation4 + $0x150] sm:$0xff]
        %v251 = vld [vmem:[#allocation4 + $0x158] sm:$0xff]
        %v252 = vld [vmem:[#allocation4 + $0x160] sm:$0xff]
        %v253 = vld [vmem:[#allocation4 + $0x168] sm:$0xff]
        %v254 = vld [vmem:[#allocation4 + $0x170] sm:$0xff]
        %v255 = vld [vmem:[#allocation4 + $0x178] sm:$0xff]
        %v256 = vld [vmem:[#allocation4 + $0x180] sm:$0xff]
        %v257 = vld [vmem:[#allocation4 + $0x188] sm:$0xff]
        %v258 = vld [vmem:[#allocation4 + $0x190] sm:$0xff]
        %v259 = vld [vmem:[#allocation4 + $0x198] sm:$0xff]
        %v260 = vld [vmem:[#allocation4 + $0x1a0] sm:$0xff]
        %v261 = vld [vmem:[#allocation4 + $0x1a8] sm:$0xff]
        %v262 = vld [vmem:[#allocation4 + $0x1b0] sm:$0xff]
        %v263 = vld [vmem:[#allocation4 + $0x1b8] sm:$0xff]
        %v264 = vld [vmem:[#allocation4 + $0x1c0] sm:$0xff]
        %v265 = vld [vmem:[#allocation4 + $0x1c8] sm:$0xff]
        %v266 = vld [vmem:[#allocation4 + $0x1d0] sm:$0xff]
        %v267 = vld [vmem:[#allocation4 + $0x1d8] sm:$0xff]
        %v268 = vld [vmem:[#allocation4 + $0x1e0] sm:$0xff]
        %v269 = vld [vmem:[#allocation4 + $0x1e8] sm:$0xff]
        %v270 = vld [vmem:[#allocation4 + $0x1f0] sm:$0xff]
        %v271 = vld [vmem:[#allocation4 + $0x1f8] sm:$0xff]
        %v272 = vld [vmem:[#allocation4 + $0x200] sm:$0xff]
        %v273 = vld [vmem:[#allocation4 + $0x208] sm:$0xff]
        %v274 = vld [vmem:[#allocation4 + $0x210] sm:$0xff]
        %v275 = vld [vmem:[#allocation4 + $0x218] sm:$0xff]
        %v276 = vld [vmem:[#allocation4 + $0x220] sm:$0xff]
        %v277 = vld [vmem:[#allocation4 + $0x228] sm:$0xff]
        %v278 = vld [vmem:[#allocation4 + $0x230] sm:$0xff]
        %v279 = vld [vmem:[#allocation4 + $0x238] sm:$0xff]
        %v280 = vld [vmem:[#allocation4 + $0x240] sm:$0xff]
        %v281 = vld [vmem:[#allocation4 + $0x248] sm:$0xff]
        %v282 = vld [vmem:[#allocation4 + $0x250] sm:$0xff]
        %v283 = vld [vmem:[#allocation4 + $0x258] sm:$0xff]
        %v284 = vld [vmem:[#allocation4 + $0x260] sm:$0xff]
        %v285 = vld [vmem:[#allocation4 + $0x268] sm:$0xff]
        %v286 = vld [vmem:[#allocation4 + $0x270] sm:$0xff]
        %v287 = vld [vmem:[#allocation4 + $0x278] sm:$0xff]
        %v288 = vld [vmem:[#allocation4 + $0x280] sm:$0xff]
        %v289 = vld [vmem:[#allocation4 + $0x288] sm:$0xff]
        %v290 = vld [vmem:[#allocation4 + $0x290] sm:$0xff]
        %v291 = vld [vmem:[#allocation4 + $0x298] sm:$0xff]
        %v292 = vld [vmem:[#allocation4 + $0x2a0] sm:$0xff]
        %v293 = vld [vmem:[#allocation4 + $0x2a8] sm:$0xff]
        %v294 = vld [vmem:[#allocation4 + $0x2b0] sm:$0xff]
        %v295 = vld [vmem:[#allocation4 + $0x2b8] sm:$0xff]
        %v296 = vld [vmem:[#allocation4 + $0x2c0] sm:$0xff]
        %v297 = vld [vmem:[#allocation4 + $0x2c8] sm:$0xff]
        %v298 = vld [vmem:[#allocation4 + $0x2d0] sm:$0xff]
        %v299 = vld [vmem:[#allocation4 + $0x2d8] sm:$0xff]
        %v300 = vld [vmem:[#allocation4 + $0x2e0] sm:$0xff]
        %v301 = vld [vmem:[#allocation4 + $0x2e8] sm:$0xff]
        %v302 = vld [vmem:[#allocation4 + $0x2f0] sm:$0xff]
        %v303 = vld [vmem:[#allocation4 + $0x2f8] sm:$0xff]
        %v304 = vld [vmem:[#allocation4 + $0x300] sm:$0xff]
        %v305 = vld [vmem:[#allocation4 + $0x308] sm:$0xff]
        %v306 = vld [vmem:[#allocation4 + $0x310] sm:$0xff]
        %v307 = vld [vmem:[#allocation4 + $0x318] sm:$0xff]
        %v308 = vld [vmem:[#allocation4 + $0x320] sm:$0xff]
        %v309 = vld [vmem:[#allocation4 + $0x328] sm:$0xff]
        %v310 = vld [vmem:[#allocation4 + $0x330] sm:$0xff]
        %v311 = vld [vmem:[#allocation4 + $0x338] sm:$0xff]
        %v312 = vld [vmem:[#allocation4 + $0x340] sm:$0xff]
        %v313 = vld [vmem:[#allocation4 + $0x348] sm:$0xff]
        %v314 = vld [vmem:[#allocation4 + $0x350] sm:$0xff]
        %v315 = vld [vmem:[#allocation4 + $0x358] sm:$0xff]
        %v316 = vld [vmem:[#allocation4 + $0x360] sm:$0xff]
        %v317 = vld [vmem:[#allocation4 + $0x368] sm:$0xff]
        %v318 = vld [vmem:[#allocation4 + $0x370] sm:$0xff]
        %v319 = vld [vmem:[#allocation4 + $0x378] sm:$0xff]
        %v320 = vld [vmem:[#allocation4 + $0x380] sm:$0xff]
        %v321 = vld [vmem:[#allocation4 + $0x388] sm:$0xff]
        %v322 = vld [vmem:[#allocation4 + $0x390] sm:$0xff]
        %v323 = vld [vmem:[#allocation4 + $0x398] sm:$0xff]
        %v324 = vld [vmem:[#allocation4 + $0x3a0] sm:$0xff]
        %v325 = vld [vmem:[#allocation4 + $0x3a8] sm:$0xff]
        %v326 = vld [vmem:[#allocation4 + $0x3b0] sm:$0xff]
        %v327 = vld [vmem:[#allocation4 + $0x3b8] sm:$0xff]
        %v328 = vld [vmem:[#allocation4 + $0x3c0] sm:$0xff]
        %v329 = vld [vmem:[#allocation4 + $0x3c8] sm:$0xff]
        %v330 = vld [vmem:[#allocation4 + $0x3d0] sm:$0xff]
        %v331 = vld [vmem:[#allocation4 + $0x3d8] sm:$0xff]
        %v332 = vld [vmem:[#allocation4 + $0x3e0] sm:$0xff]
        %v333 = vld [vmem:[#allocation4 + $0x3e8] sm:$0xff]
        %v334 = vld [vmem:[#allocation4 + $0x3f0] sm:$0xff]
        %v335 = vld [vmem:[#allocation4 + $0x3f8] sm:$0xff]
        %v336 = vld [vmem:[#allocation4 + $0x400] sm:$0xff]
        %v337 = vld [vmem:[#allocation4 + $0x408] sm:$0xff]
        %v338 = vld [vmem:[#allocation4 + $0x410] sm:$0xff]
        %v339 = vld [vmem:[#allocation4 + $0x418] sm:$0xff]
        %v340 = vld [vmem:[#allocation4 + $0x420] sm:$0xff]
        %v341 = vld [vmem:[#allocation4 + $0x428] sm:$0xff]
        %v342 = vld [vmem:[#allocation4 + $0x430] sm:$0xff]
        %v343 = vld [vmem:[#allocation4 + $0x438] sm:$0xff]
        %v344 = vld [vmem:[#allocation4 + $0x440] sm:$0xff]
        %v345 = vld [vmem:[#allocation4 + $0x448] sm:$0xff]
        %v346 = vld [vmem:[#allocation4 + $0x450] sm:$0xff]
        %v347 = vld [vmem:[#allocation4 + $0x458] sm:$0xff]
        %v348 = vld [vmem:[#allocation4 + $0x460] sm:$0xff]
        %v349 = vld [vmem:[#allocation4 + $0x468] sm:$0xff]
        %v350 = vld [vmem:[#allocation4 + $0x470] sm:$0xff]
        %v351 = vld [vmem:[#allocation4 + $0x478] sm:$0xff]
        %v352 = vld [vmem:[#allocation4 + $0x480] sm:$0xff]
        %v353 = vld [vmem:[#allocation4 + $0x488] sm:$0xff]
        %v354 = vld [vmem:[#allocation4 + $0x490] sm:$0xff]
        %v355 = vld [vmem:[#allocation4 + $0x498] sm:$0xff]
        %v356 = vld [vmem:[#allocation4 + $0x4a0] sm:$0xff]
        %v357 = vld [vmem:[#allocation4 + $0x4a8] sm:$0xff]
        %v358 = vld [vmem:[#allocation4 + $0x4b0] sm:$0xff]
        %v359 = vld [vmem:[#allocation4 + $0x4b8] sm:$0xff]
        %v360 = vld [vmem:[#allocation4 + $0x4c0] sm:$0xff]
        %v361 = vld [vmem:[#allocation4 + $0x4c8] sm:$0xff]
        %v362 = vld [vmem:[#allocation4 + $0x4d0] sm:$0xff]
        %v363 = vld [vmem:[#allocation4 + $0x4d8] sm:$0xff]
        %v364 = vld [vmem:[#allocation4 + $0x4e0] sm:$0xff]
        %v365 = vld [vmem:[#allocation4 + $0x4e8] sm:$0xff]
        %v366 = vld [vmem:[#allocation4 + $0x4f0] sm:$0xff]
        %v367 = vld [vmem:[#allocation4 + $0x4f8] sm:$0xff]
        %v368 = vld [vmem:[#allocation4 + $0x500] sm:$0xff]
        %v369 = vld [vmem:[#allocation4 + $0x508] sm:$0xff]
        %v370 = vld [vmem:[#allocation4 + $0x510] sm:$0xff]
        %v371 = vld [vmem:[#allocation4 + $0x518] sm:$0xff]
        %v372 = vld [vmem:[#allocation4 + $0x520] sm:$0xff]
        %v373 = vld [vmem:[#allocation4 + $0x528] sm:$0xff]
        %v374 = vld [vmem:[#allocation4 + $0x530] sm:$0xff]
        %v375 = vld [vmem:[#allocation4 + $0x538] sm:$0xff]
        %v376 = vld [vmem:[#allocation4 + $0x540] sm:$0xff]
        %v377 = vld [vmem:[#allocation4 + $0x548] sm:$0xff]
        %v378 = vld [vmem:[#allocation4 + $0x550] sm:$0xff]
        %v379 = vld [vmem:[#allocation4 + $0x558] sm:$0xff]
        %v380 = vld [vmem:[#allocation4 + $0x560] sm:$0xff]
        %v381 = vld [vmem:[#allocation4 + $0x568] sm:$0xff]
        %v382 = vld [vmem:[#allocation4 + $0x570] sm:$0xff]
        %v383 = vld [vmem:[#allocation4 + $0x578] sm:$0xff]
        %v384 = vld [vmem:[#allocation4 + $0x580] sm:$0xff]
        %v385 = vld [vmem:[#allocation4 + $0x588] sm:$0xff]
        %v386 = vld [vmem:[#allocation4 + $0x590] sm:$0xff]
        %v387 = vld [vmem:[#allocation4 + $0x598] sm:$0xff]
        %v388 = vld [vmem:[#allocation4 + $0x5a0] sm:$0xff]
        %v389 = vld [vmem:[#allocation4 + $0x5a8] sm:$0xff]
        %v390 = vld [vmem:[#allocation4 + $0x5b0] sm:$0xff]
        %v391 = vld [vmem:[#allocation4 + $0x5b8] sm:$0xff]
        %v392 = vld [vmem:[#allocation4 + $0x5c0] sm:$0xff]
        %v393 = vld [vmem:[#allocation4 + $0x5c8] sm:$0xff]
        %v394 = vld [vmem:[#allocation4 + $0x5d0] sm:$0xff]
        %v395 = vld [vmem:[#allocation4 + $0x5d8] sm:$0xff]
        %v396 = vld [vmem:[#allocation4 + $0x5e0] sm:$0xff]
        %v397 = vld [vmem:[#allocation4 + $0x5e8] sm:$0xff]
        %v398 = vld [vmem:[#allocation4 + $0x5f0] sm:$0xff]
        %v399 = vld [vmem:[#allocation4 + $0x5f8] sm:$0xff]
        %v400 = vld [vmem:[#allocation4 + $0x600] sm:$0xff]
        %v401 = vld [vmem:[#allocation4 + $0x608] sm:$0xff]
        %v402 = vld [vmem:[#allocation4 + $0x610] sm:$0xff]
        %v403 = vld [vmem:[#allocation4 + $0x618] sm:$0xff]
        %v404 = vld [vmem:[#allocation4 + $0x620] sm:$0xff]
        %v405 = vld [vmem:[#allocation4 + $0x628] sm:$0xff]
        %v406 = vld [vmem:[#allocation4 + $0x630] sm:$0xff]
        %v407 = vld [vmem:[#allocation4 + $0x638] sm:$0xff]
        %v408 = vld [vmem:[#allocation4 + $0x640] sm:$0xff]
        %v409 = vld [vmem:[#allocation4 + $0x648] sm:$0xff]
        %v410 = vld [vmem:[#allocation4 + $0x650] sm:$0xff]
        %v411 = vld [vmem:[#allocation4 + $0x658] sm:$0xff]
        %v412 = vld [vmem:[#allocation4 + $0x660] sm:$0xff]
        %v413 = vld [vmem:[#allocation4 + $0x668] sm:$0xff]
        %v414 = vld [vmem:[#allocation4 + $0x670] sm:$0xff]
        %v415 = vld [vmem:[#allocation4 + $0x678] sm:$0xff]
        %v416 = vld [vmem:[#allocation4 + $0x680] sm:$0xff]
        %v417 = vld [vmem:[#allocation4 + $0x688] sm:$0xff]
        %v418 = vld [vmem:[#allocation4 + $0x690] sm:$0xff]
        %v419 = vld [vmem:[#allocation4 + $0x698] sm:$0xff]
        %v420 = vld [vmem:[#allocation4 + $0x6a0] sm:$0xff]
        %v421 = vld [vmem:[#allocation4 + $0x6a8] sm:$0xff]
        %v422 = vld [vmem:[#allocation4 + $0x6b0] sm:$0xff]
        %v423 = vld [vmem:[#allocation4 + $0x6b8] sm:$0xff]
        %v424 = vld [vmem:[#allocation4 + $0x6c0] sm:$0xff]
        %v425 = vld [vmem:[#allocation4 + $0x6c8] sm:$0xff]
        %v426 = vld [vmem:[#allocation4 + $0x6d0] sm:$0xff]
        %v427 = vld [vmem:[#allocation4 + $0x6d8] sm:$0xff]
        %v428 = vld [vmem:[#allocation4 + $0x6e0] sm:$0xff]
        %v429 = vld [vmem:[#allocation4 + $0x6e8] sm:$0xff]
        %v430 = vld [vmem:[#allocation4 + $0x6f0] sm:$0xff]
        %v431 = vld [vmem:[#allocation4 + $0x6f8] sm:$0xff]
        %v432 = vld [vmem:[#allocation4 + $0x700] sm:$0xff]
        %v433 = vld [vmem:[#allocation4 + $0x708] sm:$0xff]
        %v434 = vld [vmem:[#allocation4 + $0x710] sm:$0xff]
        %v435 = vld [vmem:[#allocation4 + $0x718] sm:$0xff]
        %v436 = vld [vmem:[#allocation4 + $0x720] sm:$0xff]
        %v437 = vld [vmem:[#allocation4 + $0x728] sm:$0xff]
        %v438 = vld [vmem:[#allocation4 + $0x730] sm:$0xff]
        %v439 = vld [vmem:[#allocation4 + $0x738] sm:$0xff]
        %v440 = vld [vmem:[#allocation4 + $0x740] sm:$0xff]
        %v441 = vld [vmem:[#allocation4 + $0x748] sm:$0xff]
        %v442 = vld [vmem:[#allocation4 + $0x750] sm:$0xff]
        %v443 = vld [vmem:[#allocation4 + $0x758] sm:$0xff]
        %v444 = vld [vmem:[#allocation4 + $0x760] sm:$0xff]
        %v445 = vld [vmem:[#allocation4 + $0x768] sm:$0xff]
        %v446 = vld [vmem:[#allocation4 + $0x770] sm:$0xff]
        %v447 = vld [vmem:[#allocation4 + $0x778] sm:$0xff]
        %v448 = vld [vmem:[#allocation4 + $0x780] sm:$0xff]
        %v449 = vld [vmem:[#allocation4 + $0x788] sm:$0xff]
        %v450 = vld [vmem:[#allocation4 + $0x790] sm:$0xff]
        %v451 = vld [vmem:[#allocation4 + $0x798] sm:$0xff]
        %v452 = vld [vmem:[#allocation4 + $0x7a0] sm:$0xff]
        %v453 = vld [vmem:[#allocation4 + $0x7a8] sm:$0xff]
        %v454 = vld [vmem:[#allocation4 + $0x7b0] sm:$0xff]
        %v455 = vld [vmem:[#allocation4 + $0x7b8] sm:$0xff]
        %v456 = vld [vmem:[#allocation4 + $0x7c0] sm:$0xff]
        %v457 = vld [vmem:[#allocation4 + $0x7c8] sm:$0xff]
        %v458 = vld [vmem:[#allocation4 + $0x7d0] sm:$0xff]
        %v459 = vld [vmem:[#allocation4 + $0x7d8] sm:$0xff]
        %v460 = vld [vmem:[#allocation4 + $0x7e0] sm:$0xff]
        %v461 = vld [vmem:[#allocation4 + $0x7e8] sm:$0xff]
        %v462 = vld [vmem:[#allocation4 + $0x7f0] sm:$0xff]
        %v463 = vld [vmem:[#allocation4 + $0x7f8] sm:$0xff]
        %v464 = vld [vmem:[#allocation4 + $0x800] sm:$0xff]
        %v465 = vld [vmem:[#allocation4 + $0x808] sm:$0xff]
        %v466 = vld [vmem:[#allocation4 + $0x810] sm:$0xff]
        %v467 = vld [vmem:[#allocation4 + $0x818] sm:$0xff]
        %v468 = vld [vmem:[#allocation4 + $0x820] sm:$0xff]
        %v469 = vld [vmem:[#allocation4 + $0x828] sm:$0xff]
        %v470 = vld [vmem:[#allocation4 + $0x830] sm:$0xff]
        %v471 = vld [vmem:[#allocation4 + $0x838] sm:$0xff]
        %v472 = vld [vmem:[#allocation4 + $0x840] sm:$0xff]
        %v473 = vld [vmem:[#allocation4 + $0x848] sm:$0xff]
        %v474 = vld [vmem:[#allocation4 + $0x850] sm:$0xff]
        %v475 = vld [vmem:[#allocation4 + $0x858] sm:$0xff]
        %v476 = vld [vmem:[#allocation4 + $0x860] sm:$0xff]
        %v477 = vld [vmem:[#allocation4 + $0x868] sm:$0xff]
        %v478 = vld [vmem:[#allocation4 + $0x870] sm:$0xff]
        %v479 = vld [vmem:[#allocation4 + $0x878] sm:$0xff]
        %v480 = vld [vmem:[#allocation4 + $0x880] sm:$0xff]
        %v481 = vld [vmem:[#allocation4 + $0x888] sm:$0xff]
        %v482 = vld [vmem:[#allocation4 + $0x890] sm:$0xff]
        %v483 = vld [vmem:[#allocation4 + $0x898] sm:$0xff]
        %v484 = vld [vmem:[#allocation4 + $0x8a0] sm:$0xff]
        %v485 = vld [vmem:[#allocation4 + $0x8a8] sm:$0xff]
        %v486 = vld [vmem:[#allocation4 + $0x8b0] sm:$0xff]
        %v487 = vld [vmem:[#allocation4 + $0x8b8] sm:$0xff]
        %v488 = vld [vmem:[#allocation4 + $0x8c0] sm:$0xff]
        %v489 = vld [vmem:[#allocation4 + $0x8c8] sm:$0xff]
        %v490 = vld [vmem:[#allocation4 + $0x8d0] sm:$0xff]
        %v491 = vld [vmem:[#allocation4 + $0x8d8] sm:$0xff]
        %v492 = vld [vmem:[#allocation4 + $0x8e0] sm:$0xff]
        %v493 = vld [vmem:[#allocation4 + $0x8e8] sm:$0xff]
        %v494 = vld [vmem:[#allocation4 + $0x8f0] sm:$0xff]
        %v495 = vld [vmem:[#allocation4 + $0x8f8] sm:$0xff]
        %v496 = vld [vmem:[#allocation4 + $0x900] sm:$0xff]
        %v497 = vld [vmem:[#allocation4 + $0x908] sm:$0xff]
        %v498 = vld [vmem:[#allocation4 + $0x910] sm:$0xff]
        %v499 = vld [vmem:[#allocation4 + $0x918] sm:$0xff]
        %v500 = vld [vmem:[#allocation4 + $0x920] sm:$0xff]
        %v501 = vld [vmem:[#allocation4 + $0x928] sm:$0xff]
        %v502 = vld [vmem:[#allocation4 + $0x930] sm:$0xff]
        %v503 = vld [vmem:[#allocation4 + $0x938] sm:$0xff]
        %v504 = vld [vmem:[#allocation4 + $0x940] sm:$0xff]
        %v505 = vld [vmem:[#allocation4 + $0x948] sm:$0xff]
        %v506 = vld [vmem:[#allocation4 + $0x950] sm:$0xff]
        %v507 = vld [vmem:[#allocation4 + $0x958] sm:$0xff]
        %v508 = vld [vmem:[#allocation4 + $0x960] sm:$0xff]
        %v509 = vld [vmem:[#allocation4 + $0x968] sm:$0xff]
        %v510 = vld [vmem:[#allocation4 + $0x970] sm:$0xff]
        %v511 = vld [vmem:[#allocation4 + $0x978] sm:$0xff]
        %v512 = vld [vmem:[#allocation4 + $0x980] sm:$0xff]
        %v513 = vld [vmem:[#allocation4 + $0x988] sm:$0xff]
        %v514 = vld [vmem:[#allocation4 + $0x990] sm:$0xff]
        %v515 = vld [vmem:[#allocation4 + $0x998] sm:$0xff]
        %v516 = vld [vmem:[#allocation4 + $0x9a0] sm:$0xff]
        %v517 = vld [vmem:[#allocation4 + $0x9a8] sm:$0xff]
        %v518 = vld [vmem:[#allocation4 + $0x9b0] sm:$0xff]
        %v519 = vld [vmem:[#allocation4 + $0x9b8] sm:$0xff]
        %v520 = vld [vmem:[#allocation4 + $0x9c0] sm:$0xff]
        %v521 = vld [vmem:[#allocation4 + $0x9c8] sm:$0xff]
        %v522 = vld [vmem:[#allocation4 + $0x9d0] sm:$0xff]
        %v523 = vld [vmem:[#allocation4 + $0x9d8] sm:$0xff]
        %v524 = vld [vmem:[#allocation4 + $0x9e0] sm:$0xff]
        %v525 = vld [vmem:[#allocation4 + $0x9e8] sm:$0xff]
        %v526 = vld [vmem:[#allocation4 + $0x9f0] sm:$0xff]
        %v527 = vld [vmem:[#allocation4 + $0x9f8] sm:$0xff]
        %v528 = vld [vmem:[#allocation4 + $0xa00] sm:$0xff]
        %v529 = vld [vmem:[#allocation4 + $0xa08] sm:$0xff]
        %v530 = vld [vmem:[#allocation4 + $0xa10] sm:$0xff]
        %v531 = vld [vmem:[#allocation4 + $0xa18] sm:$0xff]
        %v532 = vld [vmem:[#allocation4 + $0xa20] sm:$0xff]
        %v533 = vld [vmem:[#allocation4 + $0xa28] sm:$0xff]
        %v534 = vld [vmem:[#allocation4 + $0xa30] sm:$0xff]
        %v535 = vld [vmem:[#allocation4 + $0xa38] sm:$0xff]
        %v536 = vld [vmem:[#allocation4 + $0xa40] sm:$0xff]
        %v537 = vld [vmem:[#allocation4 + $0xa48] sm:$0xff]
        %v538 = vld [vmem:[#allocation4 + $0xa50] sm:$0xff]
        %v539 = vld [vmem:[#allocation4 + $0xa58] sm:$0xff]
        %v540 = vld [vmem:[#allocation4 + $0xa60] sm:$0xff]
        %v541 = vld [vmem:[#allocation4 + $0xa68] sm:$0xff]
        %v542 = vld [vmem:[#allocation4 + $0xa70] sm:$0xff]
        %v543 = vld [vmem:[#allocation4 + $0xa78] sm:$0xff]
        %v544 = vld [vmem:[#allocation4 + $0xa80] sm:$0xff]
        %v545 = vld [vmem:[#allocation4 + $0xa88] sm:$0xff]
        %v546 = vld [vmem:[#allocation4 + $0xa90] sm:$0xff]
        %v547 = vld [vmem:[#allocation4 + $0xa98] sm:$0xff]
        %v548 = vld [vmem:[#allocation4 + $0xaa0] sm:$0xff]
        %v549 = vld [vmem:[#allocation4 + $0xaa8] sm:$0xff]
        %v550 = vld [vmem:[#allocation4 + $0xab0] sm:$0xff]
        %v551 = vld [vmem:[#allocation4 + $0xab8] sm:$0xff]
        %v552 = vld [vmem:[#allocation4 + $0xac0] sm:$0xff]
        %v553 = vld [vmem:[#allocation4 + $0xac8] sm:$0xff]
        %v554 = vld [vmem:[#allocation4 + $0xad0] sm:$0xff]
        %v555 = vld [vmem:[#allocation4 + $0xad8] sm:$0xff]
        %v556 = vld [vmem:[#allocation4 + $0xae0] sm:$0xff]
        %v557 = vld [vmem:[#allocation4 + $0xae8] sm:$0xff]
        %v558 = vld [vmem:[#allocation4 + $0xaf0] sm:$0xff]
        %v559 = vld [vmem:[#allocation4 + $0xaf8] sm:$0xff]
        %v560 = vld [vmem:[#allocation4 + $0xb00] sm:$0xff]
        %v561 = vld [vmem:[#allocation4 + $0xb08] sm:$0xff]
        %v562 = vld [vmem:[#allocation4 + $0xb10] sm:$0xff]
        %v563 = vld [vmem:[#allocation4 + $0xb18] sm:$0xff]
        %v564 = vld [vmem:[#allocation4 + $0xb20] sm:$0xff]
        %v565 = vld [vmem:[#allocation4 + $0xb28] sm:$0xff]
        %v566 = vld [vmem:[#allocation4 + $0xb30] sm:$0xff]
        %v567 = vld [vmem:[#allocation4 + $0xb38] sm:$0xff]
        %v568 = vld [vmem:[#allocation4 + $0xb40] sm:$0xff]
        %v569 = vld [vmem:[#allocation4 + $0xb48] sm:$0xff]
        %v570 = vld [vmem:[#allocation4 + $0xb50] sm:$0xff]
        %v571 = vld [vmem:[#allocation4 + $0xb58] sm:$0xff]
        %v572 = vld [vmem:[#allocation4 + $0xb60] sm:$0xff]
        %v573 = vld [vmem:[#allocation4 + $0xb68] sm:$0xff]
        %v574 = vld [vmem:[#allocation4 + $0xb70] sm:$0xff]
        %v575 = vld [vmem:[#allocation4 + $0xb78] sm:$0xff]
        %v576 = vld [vmem:[#allocation4 + $0xb80] sm:$0xff]
        %v577 = vld [vmem:[#allocation4 + $0xb88] sm:$0xff]
        %v578 = vld [vmem:[#allocation4 + $0xb90] sm:$0xff]
        %v579 = vld [vmem:[#allocation4 + $0xb98] sm:$0xff]
        %v580 = vld [vmem:[#allocation4 + $0xba0] sm:$0xff]
        %v581 = vld [vmem:[#allocation4 + $0xba8] sm:$0xff]
        %v582 = vld [vmem:[#allocation4 + $0xbb0] sm:$0xff]
        %v583 = vld [vmem:[#allocation4 + $0xbb8] sm:$0xff]
        %v584 = vld [vmem:[#allocation4 + $0xbc0] sm:$0xff]
        %v585 = vld [vmem:[#allocation4 + $0xbc8] sm:$0xff]
        %v586 = vld [vmem:[#allocation4 + $0xbd0] sm:$0xff]
        %v587 = vld [vmem:[#allocation4 + $0xbd8] sm:$0xff]
        %v588 = vld [vmem:[#allocation4 + $0xbe0] sm:$0xff]
        %v589 = vld [vmem:[#allocation4 + $0xbe8] sm:$0xff]
        %v590 = vld [vmem:[#allocation4 + $0xbf0] sm:$0xff]
        %v591 = vld [vmem:[#allocation4 + $0xbf8] sm:$0xff]
        %592 = vmatprep.subr.mxu0 %v209
        %593 = vmatpush1.msra.mxu0 %v208
        %594 = vmatprep.subr.mxu0 %v215
        %595 = vmatpush1.msra.mxu0 %v214
        %596 = vmatprep.subr.mxu0 %v221
        %597 = vmatpush1.msra.mxu0 %v220
        %598 = vmatprep.subr.mxu0 %v227
        %599 = vmatpush1.msra.mxu0 %v226
        %600 = vmatprep.subr.mxu0 %v233
        %601 = vmatpush1.msra.mxu0 %v232
        %602 = vmatprep.subr.mxu0 %v239
        %603 = vmatpush1.msra.mxu0 %v238
        %604 = vmatprep.subr.mxu0 %v245
        %605 = vmatpush1.msra.mxu0 %v244
        %606 = vmatprep.subr.mxu0 %v251
        %607 = vmatpush1.msra.mxu0 %v250
        %608 = vmatprep.subr.mxu0 %v257
        %609 = vmatpush1.msra.mxu0 %v256
        %610 = vmatprep.subr.mxu0 %v263
        %611 = vmatpush1.msra.mxu0 %v262
        %612 = vmatprep.subr.mxu0 %v269
        %613 = vmatpush1.msra.mxu0 %v268
        %614 = vmatprep.subr.mxu0 %v275
        %615 = vmatpush1.msra.mxu0 %v274
        %616 = vmatprep.subr.mxu0 %v281
        %617 = vmatpush1.msra.mxu0 %v280
        %618 = vmatprep.subr.mxu0 %v287
        %619 = vmatpush1.msra.mxu0 %v286
        %620 = vmatprep.subr.mxu0 %v293
        %621 = vmatpush1.msra.mxu0 %v292
        %622 = vmatprep.subr.mxu0 %v299
        %623 = vmatpush1.msra.mxu0 %v298
        %624 = vmatprep.subr.mxu0 %v305
        %625 = vmatpush1.msra.mxu0 %v304
        %626 = vmatprep.subr.mxu0 %v311
        %627 = vmatpush1.msra.mxu0 %v310
        %628 = vmatprep.subr.mxu0 %v317
        %629 = vmatpush1.msra.mxu0 %v316
        %630 = vmatprep.subr.mxu0 %v323
        %631 = vmatpush1.msra.mxu0 %v322
        %632 = vmatprep.subr.mxu0 %v329
        %633 = vmatpush1.msra.mxu0 %v328
        %634 = vmatprep.subr.mxu0 %v335
        %635 = vmatpush1.msra.mxu0 %v334
        %636 = vmatprep.subr.mxu0 %v341
        %637 = vmatpush1.msra.mxu0 %v340
        %638 = vmatprep.subr.mxu0 %v347
        %639 = vmatpush1.msra.mxu0 %v346
        %640 = vmatprep.subr.mxu0 %v353
        %641 = vmatpush1.msra.mxu0 %v352
        %642 = vmatprep.subr.mxu0 %v359
        %643 = vmatpush1.msra.mxu0 %v358
        %644 = vmatprep.subr.mxu0 %v365
        %645 = vmatpush1.msra.mxu0 %v364
        %646 = vmatprep.subr.mxu0 %v371
        %647 = vmatpush1.msra.mxu0 %v370
        %648 = vmatprep.subr.mxu0 %v377
        %649 = vmatpush1.msra.mxu0 %v376
        %650 = vmatprep.subr.mxu0 %v383
        %651 = vmatpush1.msra.mxu0 %v382
        %652 = vmatprep.subr.mxu0 %v389
        %653 = vmatpush1.msra.mxu0 %v388
        %654 = vmatprep.subr.mxu0 %v395
        %655 = vmatpush1.msra.mxu0 %v394
        %656 = vmatprep.mubr.f32.mxu0 %v205
        %657 = vmatmul.mubr.f32.gmra.mrb[0].mxu0 %v204
        %v658 = vpop.f32.mrb[0].mxu0
        %v659 = vadd.f32 0.0, %v658
        %v660 = vpop.f32.mrb[0].mxu0
        %v661 = vadd.f32 0.0, %v660
        %662 = vdwg.mxu0
        %663 = vmatprep.subr.mxu0 %v401
        %664 = vmatpush1.msra.mxu0 %v400
        %665 = vmatprep.subr.mxu0 %v407
        %666 = vmatpush1.msra.mxu0 %v406
        %667 = vmatprep.subr.mxu0 %v413
        %668 = vmatpush1.msra.mxu0 %v412
        %669 = vmatprep.subr.mxu0 %v419
        %670 = vmatpush1.msra.mxu0 %v418
        %671 = vmatprep.subr.mxu0 %v425
        %672 = vmatpush1.msra.mxu0 %v424
        %673 = vmatprep.subr.mxu0 %v431
        %674 = vmatpush1.msra.mxu0 %v430
        %675 = vmatprep.subr.mxu0 %v437
        %676 = vmatpush1.msra.mxu0 %v436
        %677 = vmatprep.subr.mxu0 %v443
        %678 = vmatpush1.msra.mxu0 %v442
        %679 = vmatprep.subr.mxu0 %v449
        %680 = vmatpush1.msra.mxu0 %v448
        %681 = vmatprep.subr.mxu0 %v455
        %682 = vmatpush1.msra.mxu0 %v454
        %683 = vmatprep.subr.mxu0 %v461
        %684 = vmatpush1.msra.mxu0 %v460
        %685 = vmatprep.subr.mxu0 %v467
        %686 = vmatpush1.msra.mxu0 %v466
        %687 = vmatprep.subr.mxu0 %v473
        %688 = vmatpush1.msra.mxu0 %v472
        %689 = vmatprep.subr.mxu0 %v479
        %690 = vmatpush1.msra.mxu0 %v478
        %691 = vmatprep.subr.mxu0 %v485
        %692 = vmatpush1.msra.mxu0 %v484
        %693 = vmatprep.subr.mxu0 %v491
        %694 = vmatpush1.msra.mxu0 %v490
        %695 = vmatprep.subr.mxu0 %v497
        %696 = vmatpush1.msra.mxu0 %v496
        %697 = vmatprep.subr.mxu0 %v503
        %698 = vmatpush1.msra.mxu0 %v502
        %699 = vmatprep.subr.mxu0 %v509
        %700 = vmatpush1.msra.mxu0 %v508
        %701 = vmatprep.subr.mxu0 %v515
        %702 = vmatpush1.msra.mxu0 %v514
        %703 = vmatprep.subr.mxu0 %v521
        %704 = vmatpush1.msra.mxu0 %v520
        %705 = vmatprep.subr.mxu0 %v527
        %706 = vmatpush1.msra.mxu0 %v526
        %707 = vmatprep.subr.mxu0 %v533
        %708 = vmatpush1.msra.mxu0 %v532
        %709 = vmatprep.subr.mxu0 %v539
        %710 = vmatpush1.msra.mxu0 %v538
        %711 = vmatprep.subr.mxu0 %v545
        %712 = vmatpush1.msra.mxu0 %v544
        %713 = vmatprep.subr.mxu0 %v551
        %714 = vmatpush1.msra.mxu0 %v550
        %715 = vmatprep.subr.mxu0 %v557
        %716 = vmatpush1.msra.mxu0 %v556
        %717 = vmatprep.subr.mxu0 %v563
        %718 = vmatpush1.msra.mxu0 %v562
        %719 = vmatprep.subr.mxu0 %v569
        %720 = vmatpush1.msra.mxu0 %v568
        %721 = vmatprep.subr.mxu0 %v575
        %722 = vmatpush1.msra.mxu0 %v574
        %723 = vmatprep.subr.mxu0 %v581
        %724 = vmatpush1.msra.mxu0 %v580
        %725 = vmatprep.subr.mxu0 %v587
        %726 = vmatpush1.msra.mxu0 %v586
        %727 = vmatprep.mubr.f32.mxu0 %v207
        %728 = vmatmul.mubr.f32.gmra.mrb[0].mxu0 %v206
        %v729 = vpop.f32.mrb[0].mxu0
        %v730 = vadd.f32 %v659, %v729
        %v731 = vpop.f32.mrb[0].mxu0
        %v732 = vadd.f32 %v661, %v731
        %733 = vdwg.mxu0
        %734 = vmatprep.subr.mxu0 %v211
        %735 = vmatpush1.msra.mxu0 %v210
        %736 = vmatprep.subr.mxu0 %v217
        %737 = vmatpush1.msra.mxu0 %v216
        %738 = vmatprep.subr.mxu0 %v223
        %739 = vmatpush1.msra.mxu0 %v222
        %740 = vmatprep.subr.mxu0 %v229
        %741 = vmatpush1.msra.mxu0 %v228
        %742 = vmatprep.subr.mxu0 %v235
        %743 = vmatpush1.msra.mxu0 %v234
        %744 = vmatprep.subr.mxu0 %v241
        %745 = vmatpush1.msra.mxu0 %v240
        %746 = vmatprep.subr.mxu0 %v247
        %747 = vmatpush1.msra.mxu0 %v246
        %748 = vmatprep.subr.mxu0 %v253
        %749 = vmatpush1.msra.mxu0 %v252
        %750 = vmatprep.subr.mxu0 %v259
        %751 = vmatpush1.msra.mxu0 %v258
        %752 = vmatprep.subr.mxu0 %v265
        %753 = vmatpush1.msra.mxu0 %v264
        %754 = vmatprep.subr.mxu0 %v271
        %755 = vmatpush1.msra.mxu0 %v270
        %756 = vmatprep.subr.mxu0 %v277
        %757 = vmatpush1.msra.mxu0 %v276
        %758 = vmatprep.subr.mxu0 %v283
        %759 = vmatpush1.msra.mxu0 %v282
        %760 = vmatprep.subr.mxu0 %v289
        %761 = vmatpush1.msra.mxu0 %v288
        %762 = vmatprep.subr.mxu0 %v295
        %763 = vmatpush1.msra.mxu0 %v294
        %764 = vmatprep.subr.mxu0 %v301
        %765 = vmatpush1.msra.mxu0 %v300
        %766 = vmatprep.subr.mxu0 %v307
        %767 = vmatpush1.msra.mxu0 %v306
        %768 = vmatprep.subr.mxu0 %v313
        %769 = vmatpush1.msra.mxu0 %v312
        %770 = vmatprep.subr.mxu0 %v319
        %771 = vmatpush1.msra.mxu0 %v318
        %772 = vmatprep.subr.mxu0 %v325
        %773 = vmatpush1.msra.mxu0 %v324
        %774 = vmatprep.subr.mxu0 %v331
        %775 = vmatpush1.msra.mxu0 %v330
        %776 = vmatprep.subr.mxu0 %v337
        %777 = vmatpush1.msra.mxu0 %v336
        %778 = vmatprep.subr.mxu0 %v343
        %779 = vmatpush1.msra.mxu0 %v342
        %780 = vmatprep.subr.mxu0 %v349
        %781 = vmatpush1.msra.mxu0 %v348
        %782 = vmatprep.subr.mxu0 %v355
        %783 = vmatpush1.msra.mxu0 %v354
        %784 = vmatprep.subr.mxu0 %v361
        %785 = vmatpush1.msra.mxu0 %v360
        %786 = vmatprep.subr.mxu0 %v367
        %787 = vmatpush1.msra.mxu0 %v366
        %788 = vmatprep.subr.mxu0 %v373
        %789 = vmatpush1.msra.mxu0 %v372
        %790 = vmatprep.subr.mxu0 %v379
        %791 = vmatpush1.msra.mxu0 %v378
        %792 = vmatprep.subr.mxu0 %v385
        %793 = vmatpush1.msra.mxu0 %v384
        %794 = vmatprep.subr.mxu0 %v391
        %795 = vmatpush1.msra.mxu0 %v390
        %796 = vmatprep.subr.mxu0 %v397
        %797 = vmatpush1.msra.mxu0 %v396
        %798 = vmatprep.mubr.f32.mxu0 %v205
        %799 = vmatmul.mubr.f32.gmra.mrb[0].mxu0 %v204
        %v800 = vpop.f32.mrb[0].mxu0
        %v801 = vadd.f32 0.0, %v800
        %v802 = vpop.f32.mrb[0].mxu0
        %v803 = vadd.f32 0.0, %v802
        %804 = vdwg.mxu0
        %805 = vmatprep.subr.mxu0 %v403
        %806 = vmatpush1.msra.mxu0 %v402
        %807 = vmatprep.subr.mxu0 %v409
        %808 = vmatpush1.msra.mxu0 %v408
        %809 = vmatprep.subr.mxu0 %v415
        %810 = vmatpush1.msra.mxu0 %v414
        %811 = vmatprep.subr.mxu0 %v421
        %812 = vmatpush1.msra.mxu0 %v420
        %813 = vmatprep.subr.mxu0 %v427
        %814 = vmatpush1.msra.mxu0 %v426
        %815 = vmatprep.subr.mxu0 %v433
        %816 = vmatpush1.msra.mxu0 %v432
        %817 = vmatprep.subr.mxu0 %v439
        %818 = vmatpush1.msra.mxu0 %v438
        %819 = vmatprep.subr.mxu0 %v445
        %820 = vmatpush1.msra.mxu0 %v444
        %821 = vmatprep.subr.mxu0 %v451
        %822 = vmatpush1.msra.mxu0 %v450
        %823 = vmatprep.subr.mxu0 %v457
        %824 = vmatpush1.msra.mxu0 %v456
        %825 = vmatprep.subr.mxu0 %v463
        %826 = vmatpush1.msra.mxu0 %v462
        %827 = vmatprep.subr.mxu0 %v469
        %828 = vmatpush1.msra.mxu0 %v468
        %829 = vmatprep.subr.mxu0 %v475
        %830 = vmatpush1.msra.mxu0 %v474
        %831 = vmatprep.subr.mxu0 %v481
        %832 = vmatpush1.msra.mxu0 %v480
        %833 = vmatprep.subr.mxu0 %v487
        %834 = vmatpush1.msra.mxu0 %v486
        %835 = vmatprep.subr.mxu0 %v493
        %836 = vmatpush1.msra.mxu0 %v492
        %837 = vmatprep.subr.mxu0 %v499
        %838 = vmatpush1.msra.mxu0 %v498
        %839 = vmatprep.subr.mxu0 %v505
        %840 = vmatpush1.msra.mxu0 %v504
        %841 = vmatprep.subr.mxu0 %v511
        %842 = vmatpush1.msra.mxu0 %v510
        %843 = vmatprep.subr.mxu0 %v517
        %844 = vmatpush1.msra.mxu0 %v516
        %845 = vmatprep.subr.mxu0 %v523
        %846 = vmatpush1.msra.mxu0 %v522
        %847 = vmatprep.subr.mxu0 %v529
        %848 = vmatpush1.msra.mxu0 %v528
        %849 = vmatprep.subr.mxu0 %v535
        %850 = vmatpush1.msra.mxu0 %v534
        %851 = vmatprep.subr.mxu0 %v541
        %852 = vmatpush1.msra.mxu0 %v540
        %853 = vmatprep.subr.mxu0 %v547
        %854 = vmatpush1.msra.mxu0 %v546
        %855 = vmatprep.subr.mxu0 %v553
        %856 = vmatpush1.msra.mxu0 %v552
        %857 = vmatprep.subr.mxu0 %v559
        %858 = vmatpush1.msra.mxu0 %v558
        %859 = vmatprep.subr.mxu0 %v565
        %860 = vmatpush1.msra.mxu0 %v564
        %861 = vmatprep.subr.mxu0 %v571
        %862 = vmatpush1.msra.mxu0 %v570
        %863 = vmatprep.subr.mxu0 %v577
        %864 = vmatpush1.msra.mxu0 %v576
        %865 = vmatprep.subr.mxu0 %v583
        %866 = vmatpush1.msra.mxu0 %v582
        %867 = vmatprep.subr.mxu0 %v589
        %868 = vmatpush1.msra.mxu0 %v588
        %869 = vmatprep.mubr.f32.mxu0 %v207
        %870 = vmatmul.mubr.f32.gmra.mrb[0].mxu0 %v206
        %v871 = vpop.f32.mrb[0].mxu0
        %v872 = vadd.f32 %v801, %v871
        %v873 = vpop.f32.mrb[0].mxu0
        %v874 = vadd.f32 %v803, %v873
        %875 = vdwg.mxu0
        %876 = vmatprep.subr.mxu0 %v213
        %877 = vmatpush1.msra.mxu0 %v212
        %878 = vmatprep.subr.mxu0 %v219
        %879 = vmatpush1.msra.mxu0 %v218
        %880 = vmatprep.subr.mxu0 %v225
        %881 = vmatpush1.msra.mxu0 %v224
        %882 = vmatprep.subr.mxu0 %v231
        %883 = vmatpush1.msra.mxu0 %v230
        %884 = vmatprep.subr.mxu0 %v237
        %885 = vmatpush1.msra.mxu0 %v236
        %886 = vmatprep.subr.mxu0 %v243
        %887 = vmatpush1.msra.mxu0 %v242
        %888 = vmatprep.subr.mxu0 %v249
        %889 = vmatpush1.msra.mxu0 %v248
        %890 = vmatprep.subr.mxu0 %v255
        %891 = vmatpush1.msra.mxu0 %v254
        %892 = vmatprep.subr.mxu0 %v261
        %893 = vmatpush1.msra.mxu0 %v260
        %894 = vmatprep.subr.mxu0 %v267
        %895 = vmatpush1.msra.mxu0 %v266
        %896 = vmatprep.subr.mxu0 %v273
        %897 = vmatpush1.msra.mxu0 %v272
        %898 = vmatprep.subr.mxu0 %v279
        %899 = vmatpush1.msra.mxu0 %v278
        %900 = vmatprep.subr.mxu0 %v285
        %901 = vmatpush1.msra.mxu0 %v284
        %902 = vmatprep.subr.mxu0 %v291
        %903 = vmatpush1.msra.mxu0 %v290
        %904 = vmatprep.subr.mxu0 %v297
        %905 = vmatpush1.msra.mxu0 %v296
        %906 = vmatprep.subr.mxu0 %v303
        %907 = vmatpush1.msra.mxu0 %v302
        %908 = vmatprep.subr.mxu0 %v309
        %909 = vmatpush1.msra.mxu0 %v308
        %910 = vmatprep.subr.mxu0 %v315
        %911 = vmatpush1.msra.mxu0 %v314
        %912 = vmatprep.subr.mxu0 %v321
        %913 = vmatpush1.msra.mxu0 %v320
        %914 = vmatprep.subr.mxu0 %v327
        %915 = vmatpush1.msra.mxu0 %v326
        %916 = vmatprep.subr.mxu0 %v333
        %917 = vmatpush1.msra.mxu0 %v332
        %918 = vmatprep.subr.mxu0 %v339
        %919 = vmatpush1.msra.mxu0 %v338
        %920 = vmatprep.subr.mxu0 %v345
        %921 = vmatpush1.msra.mxu0 %v344
        %922 = vmatprep.subr.mxu0 %v351
        %923 = vmatpush1.msra.mxu0 %v350
        %924 = vmatprep.subr.mxu0 %v357
        %925 = vmatpush1.msra.mxu0 %v356
        %926 = vmatprep.subr.mxu0 %v363
        %927 = vmatpush1.msra.mxu0 %v362
        %928 = vmatprep.subr.mxu0 %v369
        %929 = vmatpush1.msra.mxu0 %v368
        %930 = vmatprep.subr.mxu0 %v375
        %931 = vmatpush1.msra.mxu0 %v374
        %932 = vmatprep.subr.mxu0 %v381
        %933 = vmatpush1.msra.mxu0 %v380
        %934 = vmatprep.subr.mxu0 %v387
        %935 = vmatpush1.msra.mxu0 %v386
        %936 = vmatprep.subr.mxu0 %v393
        %937 = vmatpush1.msra.mxu0 %v392
        %938 = vmatprep.subr.mxu0 %v399
        %939 = vmatpush1.msra.mxu0 %v398
        %940 = vmatprep.mubr.f32.mxu0 %v205
        %941 = vmatmul.mubr.f32.gmra.mrb[0].mxu0 %v204
        %v942 = vpop.f32.mrb[0].mxu0
        %v943 = vadd.f32 0.0, %v942
        %v944 = vpop.f32.mrb[0].mxu0
        %v945 = vadd.f32 0.0, %v944
        %946 = vdwg.mxu0
        %947 = vmatprep.subr.mxu0 %v405
        %948 = vmatpush1.msra.mxu0 %v404
        %949 = vmatprep.subr.mxu0 %v411
        %950 = vmatpush1.msra.mxu0 %v410
        %951 = vmatprep.subr.mxu0 %v417
        %952 = vmatpush1.msra.mxu0 %v416
        %953 = vmatprep.subr.mxu0 %v423
        %954 = vmatpush1.msra.mxu0 %v422
        %955 = vmatprep.subr.mxu0 %v429
        %956 = vmatpush1.msra.mxu0 %v428
        %957 = vmatprep.subr.mxu0 %v435
        %958 = vmatpush1.msra.mxu0 %v434
        %959 = vmatprep.subr.mxu0 %v441
        %960 = vmatpush1.msra.mxu0 %v440
        %961 = vmatprep.subr.mxu0 %v447
        %962 = vmatpush1.msra.mxu0 %v446
        %963 = vmatprep.subr.mxu0 %v453
        %964 = vmatpush1.msra.mxu0 %v452
        %965 = vmatprep.subr.mxu0 %v459
        %966 = vmatpush1.msra.mxu0 %v458
        %967 = vmatprep.subr.mxu0 %v465
        %968 = vmatpush1.msra.mxu0 %v464
        %969 = vmatprep.subr.mxu0 %v471
        %970 = vmatpush1.msra.mxu0 %v470
        %971 = vmatprep.subr.mxu0 %v477
        %972 = vmatpush1.msra.mxu0 %v476
        %973 = vmatprep.subr.mxu0 %v483
        %974 = vmatpush1.msra.mxu0 %v482
        %975 = vmatprep.subr.mxu0 %v489
        %976 = vmatpush1.msra.mxu0 %v488
        %977 = vmatprep.subr.mxu0 %v495
        %978 = vmatpush1.msra.mxu0 %v494
        %979 = vmatprep.subr.mxu0 %v501
        %980 = vmatpush1.msra.mxu0 %v500
        %981 = vmatprep.subr.mxu0 %v507
        %982 = vmatpush1.msra.mxu0 %v506
        %983 = vmatprep.subr.mxu0 %v513
        %984 = vmatpush1.msra.mxu0 %v512
        %985 = vmatprep.subr.mxu0 %v519
        %986 = vmatpush1.msra.mxu0 %v518
        %987 = vmatprep.subr.mxu0 %v525
        %988 = vmatpush1.msra.mxu0 %v524
        %989 = vmatprep.subr.mxu0 %v531
        %990 = vmatpush1.msra.mxu0 %v530
        %991 = vmatprep.subr.mxu0 %v537
        %992 = vmatpush1.msra.mxu0 %v536
        %993 = vmatprep.subr.mxu0 %v543
        %994 = vmatpush1.msra.mxu0 %v542
        %995 = vmatprep.subr.mxu0 %v549
        %996 = vmatpush1.msra.mxu0 %v548
        %997 = vmatprep.subr.mxu0 %v555
        %998 = vmatpush1.msra.mxu0 %v554
        %999 = vmatprep.subr.mxu0 %v561
        %1000 = vmatpush1.msra.mxu0 %v560
        %1001 = vmatprep.subr.mxu0 %v567
        %1002 = vmatpush1.msra.mxu0 %v566
        %1003 = vmatprep.subr.mxu0 %v573
        %1004 = vmatpush1.msra.mxu0 %v572
        %1005 = vmatprep.subr.mxu0 %v579
        %1006 = vmatpush1.msra.mxu0 %v578
        %1007 = vmatprep.subr.mxu0 %v585
        %1008 = vmatpush1.msra.mxu0 %v584
        %1009 = vmatprep.subr.mxu0 %v591
        %1010 = vmatpush1.msra.mxu0 %v590
        %1011 = vmatprep.mubr.f32.mxu0 %v207
        %1012 = vmatmul.mubr.f32.gmra.mrb[0].mxu0 %v206
        %v1013 = vpop.f32.mrb[0].mxu0
        %v1014 = vadd.f32 %v943, %v1013
        %v1015 = vpop.f32.mrb[0].mxu0
        %v1016 = vadd.f32 %v945, %v1015
        %1017 = vdwg.mxu0
        %v1019 = vrot.slane %v732, 7
        %vm1021 = vcmask 1040384
        %v1022 = vsel %vm1021, 0.0, %v1019
        %v1023 = vsel %vm1021, %v1019, 0.0
        %v1024 = vadd.f32 %v730, %v1022
        %v1025 = vadd.f32 %v1023, 0.0
        %v1027 = vrot.slane %v872, 6
        %vm1029 = vcmask 1041408
        %v1030 = vsel %vm1029, 0.0, %v1027
        %v1031 = vsel %vm1029, %v1027, 0.0
        %v1032 = vadd.f32 %v1024, %v1030
        %v1033 = vadd.f32 %v1025, %v1031
        %v1035 = vrot.slane %v874, 5
        %vm1037 = vcmask 1042432
        %v1038 = vsel %vm1037, 0.0, %v1035
        %v1039 = vsel %vm1037, %v1035, 0.0
        %v1040 = vadd.f32 %v1032, %v1038
        %v1041 = vadd.f32 %v1033, %v1039
        %v1043 = vrot.slane %v1014, 4
        %vm1045 = vcmask 1043456
        %v1046 = vsel %vm1045, 0.0, %v1043
        %v1047 = vsel %vm1045, %v1043, 0.0
        %v1048 = vadd.f32 %v1040, %v1046
        %v1049 = vadd.f32 %v1041, %v1047
        %v1051 = vrot.slane %v1016, 3
        %vm1053 = vcmask 1044480
        %v1054 = vsel %vm1053, 0.0, %v1051
        %v1055 = vadd.f32 %v1048, %v1054
        %v1056 = vadd.f32 %v1049, %v1051
        %v1057 = vld [vmem:[%s2] sm:$0xff]
        %v1058 = vld [vmem:[%s2 + $0x8] sm:$0x1f]
        %v1059 = vmul.f32 %v1055, %v1057
        %v1060 = vmul.f32 %v1056, %v1058
        %1061 = vst [vmem:[%s203] sm:$0xff] %v1059
        %1062 = vst [vmem:[%s203 + $0x8] sm:$0x1f] %v1060
        %p1063 = scmp.lt.s32.totalorder %s18, 1
        %s1064 = scalar_select %p1063, %s18, 1
        %s1065 = smul.addr %s1064, 2
        %s1066 = smul.addr %s1065, 8
        %s1067 = scalar_lea.vmem %s3, %s1066
        // Predicated region
        $region41: #{tpu_custom_call.1} parent=31 // pred_check
          %p1068 = pneg %p104
        $region42: #{tpu_custom_call.1} parent=31 // pred_check_branch
          %1070 = sbr.rel (%p1068) target = $region44
        $region43: #{tpu_custom_call.1} parent=31 // pred_region
          _
        $region44: #{tpu_custom_call.1} parent=31 // pred_fallthru
          _
      $region32: #{tpu_custom_call.1} parent=5 // pred_fallthru
        _
      %p1071 = scmp.le.s32.totalorder 2, %s13
      // Predicated region
      $region45: #{tpu_custom_call.1} parent=5 // pred_check
        %p1072 = pneg %p1071
      $region46: #{tpu_custom_call.1} parent=5 // pred_check_branch
        %1074 = sbr.rel (%p1072) target = $region48
      $region47: #{tpu_custom_call.1} parent=5 // pred_region
        %s1075 = ssub.s32 %s13, 2
        // Predicated region
        $region49: #{tpu_custom_call.1} parent=47 // pred_check
          %p1076 = pneg %p110
        $region50: #{tpu_custom_call.1} parent=47 // pred_check_branch
          %1078 = sbr.rel (%p1076) target = $region52
        $region51: #{tpu_custom_call.1} parent=47 // pred_region
          %p1079 = scmp.lt.s32.totalorder %s19, 1
          %s1080 = scalar_select %p1079, %s19, 1
          %s1081 = smul.addr %s1080, 2
          %s1082 = smul.addr %s1081, 8
          %s1083 = scalar_lea.vmem %s3, %s1082
        $region52: #{tpu_custom_call.1} parent=47 // pred_fallthru
          _
      $region48: #{tpu_custom_call.1} parent=5 // pred_fallthru
        _
    $region6: #{tpu_custom_call.1} parent=1 // loop_footer
      %s17 = sadd.s32 1, %s13
    $region7: #{tpu_custom_call.1} parent=1 // loop_footer_branch
      %12 = sbr.rel target = $region3
    $region8: #{tpu_custom_call.1} parent=1 // loop_exit
      _
    %1084 = vsyncpa [#allocation3], 1
    %s1085 = scalar_lea.sflag [#allocation3], 1
    %1086 = vsyncpa %s1085, 1
    %1087 = vsyncpa [#allocation5], 1

</llo_original>
